<compile_context>
chip_gen: v7x
topology: tpu7x:2x2x1
jax: 0.10.0
libtpu: 0.0.40
codegen_flags: <defaults>
</compile_context>

<pallas_src>
import jax
import jax.numpy as jnp
from jax import lax
from jax.experimental import pallas as pl
from jax.experimental.pallas import tpu as pltpu

LANES = 128
SUBLANES = 8
ALIGN = SUBLANES * LANES          # 1024 elements: keeps rows a multiple of 8
MAX_TILE_R = 1024                 # (1024, 128) f32 block = 512 KiB; ~86% of HBM roofline
N_CORE_SPLITS = 2                 # leading "parallel" axis for v7x megacore


def _make_mape_kernel(total_n: int, tile_r: int, bpc: int, needs_mask: bool):
    """Build the kernel.

    total_n    -- true (unpadded) number of elements (for tail masking).
    tile_r     -- rows per block (multiple of 8).
    bpc        -- row-blocks assigned to each logical core split.
    needs_mask -- whether any padded / out-of-range elements can appear.
    """
    n_groups = tile_r // SUBLANES

    def mape_kernel(pred_ref, true_ref, out_ref, acc_ref):
        c = pl.program_id(0)          # core-split index ("parallel")
        i = pl.program_id(1)          # row-block index within the split ("arbitrary")

        @pl.when(i == 0)
        def _init():
            acc_ref[...] = jnp.zeros_like(acc_ref)

        # Upcast in-kernel (halves HBM traffic for bf16 inputs; exact for f32).
        y_true = true_ref[...].astype(jnp.float32)
        y_pred = pred_ref[...].astype(jnp.float32)
        eps = jnp.float32(1e-10)
        val = jnp.abs((y_true - y_pred) / (y_true + eps))

        if needs_mask:
            # Mask out padded elements, garbage rows of a partial last block,
            # and fully out-of-range (clamped) duplicate blocks, using the
            # LOGICAL (unclamped) block index.
            # NOTE: int32 element ids limit inputs to < 2**31 elements.
            logical_block = c * bpc + i
            row_ids = lax.broadcasted_iota(jnp.int32, (tile_r, LANES), 0)
            lane_ids = lax.broadcasted_iota(jnp.int32, (tile_r, LANES), 1)
            elem_ids = (logical_block * tile_r + row_ids) * LANES + lane_ids
            val = jnp.where(elem_ids < total_n, val, 0.0)

        # Reduce only over the sublane-group axis -> (8, 128) vreg accumulator
        # (pure VPU adds; free under the HBM-bandwidth roofline).
        acc_ref[...] += val.reshape(n_groups, SUBLANES, LANES).sum(axis=0)

        @pl.when(i == pl.num_programs(1) - 1)
        def _store():
            out_ref[...] = acc_ref[...]

    return mape_kernel


def mape_loss(y_pred: jax.Array, y_true: jax.Array) -> jax.Array:
    """Pallas implementation of MAPELoss.forward. Returns a scalar float32."""
    assert y_pred.shape == y_true.shape
    total_n = int(y_pred.size)
    assert total_n > 0

    flat_pred = y_pred.reshape(-1)
    flat_true = y_true.reshape(-1)

    # Align to a multiple of 8*128 so the (rows, 128) reshape is zero-copy for
    # the common case. Pad values are irrelevant: the kernel masks them out.
    padded_n = ((total_n + ALIGN - 1) // ALIGN) * ALIGN
    if padded_n != total_n:
        # TODO(synk): for large unaligned inputs this jnp.pad still copies the
        # whole array; stream the <1024-element tail separately to avoid it.
        pad = padded_n - total_n
        flat_pred = jnp.pad(flat_pred, (0, pad))
        flat_true = jnp.pad(flat_true, (0, pad))

    rows = padded_n // LANES                      # multiple of 8
    pred2d = flat_pred.reshape(rows, LANES)
    true2d = flat_true.reshape(rows, LANES)

    tile_r = min(MAX_TILE_R, rows)                # multiple of 8, <= rows
    n_blocks = (rows + tile_r - 1) // tile_r      # total row-blocks
    n_splits = N_CORE_SPLITS if n_blocks >= N_CORE_SPLITS else 1
    bpc = (n_blocks + n_splits - 1) // n_splits   # row-blocks per core split

    needs_mask = (
        (padded_n != total_n)            # padded tail elements
        or (rows % tile_r != 0)          # partial last block
        or (n_splits * bpc != n_blocks)  # clamped duplicate block on one split
    )

    max_block = n_blocks - 1

    def in_index_map(c, i):
        # Clamp so the DMA never targets a fully out-of-range block; the
        # duplicate block's contribution is masked out in-kernel.
        return (jnp.minimum(c * bpc + i, max_block), 0)

    partials = pl.pallas_call(
        _make_mape_kernel(total_n, tile_r, bpc, needs_mask),
        out_shape=jax.ShapeDtypeStruct((n_splits * SUBLANES, LANES), jnp.float32),
        grid_spec=pltpu.PrefetchScalarGridSpec(
            num_scalar_prefetch=0,
            grid=(n_splits, bpc),
            in_specs=[
                pl.BlockSpec((tile_r, LANES), in_index_map),
                pl.BlockSpec((tile_r, LANES), in_index_map),
            ],
            out_specs=pl.BlockSpec((SUBLANES, LANES), lambda c, i: (c, 0)),
            scratch_shapes=[pltpu.VMEM((SUBLANES, LANES), jnp.float32)],
        ),
        compiler_params=pltpu.CompilerParams(
            dimension_semantics=("parallel", "arbitrary"),
        ),
    )(pred2d, true2d)

    # Tiny final reduction (at most 2 x 8 x 128 floats) + mean normalization.
    return jnp.sum(partials) / jnp.float32(total_n)


if __name__ == "__main__":
    key = jax.random.PRNGKey(0)

    def reference(y_pred, y_true):
        return jnp.mean(jnp.abs((y_true - y_pred) / (y_true + 1e-10)))

    # 1) spec-like small NCHW input (single aligned tile, no masking)
    # 2) unaligned size -> pad + in-kernel element mask
    # 3) multi-block input -> 2-way core split, partial last block, clamped
    #    duplicate block (exercises every kernel path)
    shapes = [(2, 4, 16, 16), (3, 7, 11), (4, 8, 96, 96)]

    for shape in shapes:
        k1, k2, key = jax.random.split(key, 3)
        y_pred = jax.random.normal(k1, shape, dtype=jnp.float32)
        # Keep y_true away from zero so the reference itself is numerically stable.
        y_true = jax.random.uniform(k2, shape, dtype=jnp.float32, minval=0.5, maxval=2.0)

        loss = jax.block_until_ready(mape_loss(y_pred, y_true))
        ref = reference(y_true=y_true, y_pred=y_pred)
        assert jnp.allclose(loss, ref, rtol=1e-5, atol=1e-6), (shape, loss, ref)

    print("KERNEL_OK")
</pallas_src>

<mosaic_0001>
module attributes {stable_mosaic.version = 11 : i64} {
  func.func @mape_kernel(%arg0: i32, %arg1: i32, %arg2: memref<16x128xf32, #tpu.memory_space<vmem>>, %arg3: memref<16x128xf32, #tpu.memory_space<vmem>>, %arg4: memref<8x128xf32, #tpu.memory_space<vmem>>, %arg5: memref<8x128xf32, #tpu.memory_space<vmem>>) attributes {dimension_semantics = [#tpu.dimension_semantics<parallel>, #tpu.dimension_semantics<arbitrary>], iteration_bounds = array<i64: 1, 1>, scalar_prefetch = 0 : i64, scratch_operands = 1 : i64, tpu.core_type = #tpu.core_type<tc>, window_params = [{transform_indices = @transform_0, window_bounds = array<i64: 16, 128>}, {transform_indices = @transform_1, window_bounds = array<i64: 16, 128>}, {transform_indices = @transform_2, window_bounds = array<i64: 8, 128>}]} {
    %c0_i32 = arith.constant 0 : i32
    %0 = arith.cmpi eq, %arg1, %c0_i32 : i32
    %1 = arith.extui %0 : i1 to i32
    %c0_i32_0 = arith.constant 0 : i32
    %2 = arith.cmpi ne, %1, %c0_i32_0 : i32
    scf.if %2 {
      %cst_11 = arith.constant 0.000000e+00 : f32
      %18 = vector.broadcast %cst_11 : f32 to vector<8x128xf32>
      %c0_12 = arith.constant 0 : index
      %c0_13 = arith.constant 0 : index
      %19 = vector.load %arg5[%c0_12, %c0_13] : memref<8x128xf32, #tpu.memory_space<vmem>>, vector<8x128xf32>
      tpu.vector_store %arg5[%c0_12, %c0_13], %18 {strides = array<i32>} : memref<8x128xf32, #tpu.memory_space<vmem>>, vector<8x128xf32>,
    } else {
    }
    %c0 = arith.constant 0 : index
    %c0_1 = arith.constant 0 : index
    %3 = vector.load %arg3[%c0, %c0_1] : memref<16x128xf32, #tpu.memory_space<vmem>>, vector<16x128xf32>
    %c0_2 = arith.constant 0 : index
    %c0_3 = arith.constant 0 : index
    %4 = vector.load %arg2[%c0_2, %c0_3] : memref<16x128xf32, #tpu.memory_space<vmem>>, vector<16x128xf32>
    %5 = arith.subf %3, %4 : vector<16x128xf32>
    %cst = arith.constant 1.000000e-10 : f32
    %6 = vector.broadcast %cst : f32 to vector<16x128xf32>
    %7 = arith.addf %3, %6 : vector<16x128xf32>
    %8 = arith.divf %5, %7 : vector<16x128xf32>
    %9 = math.absf %8 : vector<16x128xf32>
    %c0_4 = arith.constant 0 : index
    %c0_5 = arith.constant 0 : index
    %10 = vector.load %arg5[%c0_4, %c0_5] : memref<8x128xf32, #tpu.memory_space<vmem>>, vector<8x128xf32>
    %11 = vector.shape_cast %9 : vector<16x128xf32> to vector<2x8x128xf32>
    %cst_6 = arith.constant dense<0.000000e+00> : vector<8x128xf32>
    %12 = vector.multi_reduction <add>, %11, %cst_6 [0] : vector<2x8x128xf32> to vector<8x128xf32>
    %13 = arith.addf %10, %12 : vector<8x128xf32>
    %c0_7 = arith.constant 0 : index
    %c0_8 = arith.constant 0 : index
    %14 = vector.load %arg5[%c0_7, %c0_8] : memref<8x128xf32, #tpu.memory_space<vmem>>, vector<8x128xf32>
    tpu.vector_store %arg5[%c0_7, %c0_8], %13 {strides = array<i32>} : memref<8x128xf32, #tpu.memory_space<vmem>>, vector<8x128xf32>,
    %c0_i32_9 = arith.constant 0 : i32
    %15 = arith.cmpi eq, %arg1, %c0_i32_9 : i32
    %16 = arith.extui %15 : i1 to i32
    %c0_i32_10 = arith.constant 0 : i32
    %17 = arith.cmpi ne, %16, %c0_i32_10 : i32
    scf.if %17 {
      %c0_11 = arith.constant 0 : index
      %c0_12 = arith.constant 0 : index
      %18 = vector.load %arg5[%c0_11, %c0_12] : memref<8x128xf32, #tpu.memory_space<vmem>>, vector<8x128xf32>
      %c0_13 = arith.constant 0 : index
      %c0_14 = arith.constant 0 : index
      %19 = vector.load %arg4[%c0_13, %c0_14] : memref<8x128xf32, #tpu.memory_space<vmem>>, vector<8x128xf32>
      tpu.vector_store %arg4[%c0_13, %c0_14], %18 {strides = array<i32>} : memref<8x128xf32, #tpu.memory_space<vmem>>, vector<8x128xf32>,
    } else {
    }
    return
  }
  func.func @transform_0(%arg0: i32, %arg1: i32) -> (i32, i32) {
    %c1_i32 = arith.constant 1 : i32
    %0 = arith.muli %arg0, %c1_i32 : i32
    %1 = arith.addi %0, %arg1 : i32
    %c0_i32 = arith.constant 0 : i32
    %2 = arith.minsi %1, %c0_i32 : i32
    %c0_i32_0 = arith.constant 0 : i32
    %c0_i32_1 = arith.constant 0 : i32
    return %2, %c0_i32_0 : i32, i32
  }
  func.func @transform_1(%arg0: i32, %arg1: i32) -> (i32, i32) {
    %c1_i32 = arith.constant 1 : i32
    %0 = arith.muli %arg0, %c1_i32 : i32
    %1 = arith.addi %0, %arg1 : i32
    %c0_i32 = arith.constant 0 : i32
    %2 = arith.minsi %1, %c0_i32 : i32
    %c0_i32_0 = arith.constant 0 : i32
    %c0_i32_1 = arith.constant 0 : i32
    return %2, %c0_i32_0 : i32, i32
  }
  func.func @transform_2(%arg0: i32, %arg1: i32) -> (i32, i32) {
    %c0_i32 = arith.constant 0 : i32
    %c0_i32_0 = arith.constant 0 : i32
    return %arg0, %c0_i32 : i32, i32
  }
}

</mosaic_0001>

<llo_original>
// kernel: tpu_custom_call.1
$region0: #{tpu_custom_call.1}
  #allocation0 [shape = 'u32[]', space=smem, size = 0x4, offset = 0x4, fixed_abs, tag = 'smem constant byte address 0x4 - core index']
  #allocation1 [shape = 'u32[144,128]{1,0:T(1,128)}', space=vmem, size = 0x12000, scoped, tag = 'internal scratch']
  #allocation2 [shape = 'f32[8,128]{1,0:T(8,128)}', space=vmem, size = 0x1000, scoped, tag = 'scratch operand']
  %s0 = inlined_call_operand.hbm [shape: f32[16,128], index: 0, kind: input, shape index: {}]
  %s1 = inlined_call_operand.hbm [shape: f32[16,128], index: 1, kind: input, shape index: {}]
  %s2 = inlined_call_operand.hbm [shape: f32[8,128], index: 2, kind: output, shape index: {}]
  %s3 = sld [smem:[#allocation0]]
  $region34: #{tpu_custom_call.1} parent=0
    _
  %s5 = ssub.s32 1, %s3
  %s6 = scalar_select 0, %s5, %s3
  $region1: #{tpu_custom_call.1} parent=0
    #allocation3 [shape = 'u8[8192]{0}', space=vmem, size = 0x2000, scoped, tag = 'input window, operand 0, single buffered']
    #allocation4 [shape = 's32[1]{0}', space=sflag, size = 0x4, scoped, tag = 'scoped memory for tpu_custom_call.1']
    #allocation5 [shape = 's32[1]{0}', space=sflag, size = 0x4, scoped, tag = 'scoped memory for tpu_custom_call.1']
    #allocation6 [shape = 'u8[8192]{0}', space=vmem, size = 0x2000, scoped, tag = 'input window, operand 1, single buffered']
    #allocation7 [shape = 's32[1]{0}', space=sflag, size = 0x4, scoped, tag = 'scoped memory for tpu_custom_call.1']
    #allocation8 [shape = 'u8[4096]{0}', space=vmem, size = 0x1000, scoped, tag = 'output window, operand 0, single buffered']
    %7 = vsyncpa [#allocation4], 0
    %8 = vsyncpa [#allocation7], 0
    %9 = vsyncpa [#allocation5], 0
    // Predicated region
    $region2: #{tpu_custom_call.1} parent=1 // pred_check
      _
    $region3: #{tpu_custom_call.1} parent=1 // pred_check_branch
      %11 = sbr.rel (0) target = $region5
    $region4: #{tpu_custom_call.1} parent=1 // pred_region
      %s12 = sadd.s32 0, 0
      %p13 = scmp.lt.s32.totalorder %s12, 0
      %s14 = scalar_select %p13, %s12, 0
      %s15 = smul.u32 2, %s14
      %s17 = ssub.s32 256, 256
      %18 = vsyncadd [#allocation4], %s17
      %s19 = smul.addr %s15, 128
      %s20 = scalar_lea.hbm %s0, %s19
      %s21 = sshll.u32 [#allocation3], 4
      %s22 = int_to_ptr.vmem [resolvable:$true] %s21
      %27 = dma.hbm_to_vmem [thread:$0]  %s20, 256, %s22, [#allocation4], 128, 128, 8
    $region5: #{tpu_custom_call.1} parent=1 // pred_fallthru
      _
    // Predicated region
    $region6: #{tpu_custom_call.1} parent=1 // pred_check
      _
    $region7: #{tpu_custom_call.1} parent=1 // pred_check_branch
      %29 = sbr.rel (0) target = $region9
    $region8: #{tpu_custom_call.1} parent=1 // pred_region
      %s30 = sadd.s32 0, 0
      %p31 = scmp.lt.s32.totalorder %s30, 0
      %s32 = scalar_select %p31, %s30, 0
      %s33 = smul.u32 2, %s32
      %s35 = ssub.s32 256, 256
      %36 = vsyncadd [#allocation7], %s35
      %s37 = smul.addr %s33, 128
      %s38 = scalar_lea.hbm %s1, %s37
      %s39 = sshll.u32 [#allocation6], 4
      %s40 = int_to_ptr.vmem [resolvable:$true] %s39
      %45 = dma.hbm_to_vmem [thread:$0]  %s38, 256, %s40, [#allocation7], 128, 128, 8
    $region9: #{tpu_custom_call.1} parent=1 // pred_fallthru
      _
    // Predicated region
    $region10: #{tpu_custom_call.1} parent=1 // pred_check
      _
    $region11: #{tpu_custom_call.1} parent=1 // pred_check_branch
      %47 = sbr.rel (0) target = $region13
    $region12: #{tpu_custom_call.1} parent=1 // pred_region
      %48 = dma.done [#allocation4], 256
    $region13: #{tpu_custom_call.1} parent=1 // pred_fallthru
      _
    // Predicated region
    $region14: #{tpu_custom_call.1} parent=1 // pred_check
      _
    $region15: #{tpu_custom_call.1} parent=1 // pred_check_branch
      %50 = sbr.rel (0) target = $region17
    $region16: #{tpu_custom_call.1} parent=1 // pred_region
      %51 = dma.done [#allocation7], 256
    $region17: #{tpu_custom_call.1} parent=1 // pred_fallthru
      _
    %s52 = sadd.s32 0, 0
    %p53 = scmp.lt.s32.totalorder %s52, 0
    %s54 = scalar_select %p53, %s52, 0
    %s55 = smul.u32 2, %s54
    %s56 = sadd.s32 0, 0
    %p57 = scmp.lt.s32.totalorder %s56, 0
    %s58 = scalar_select %p57, %s56, 0
    %s59 = smul.u32 2, %s58
    %p60 = scmp.eq.s32.totalorder 0, 0
    // Predicated region
    $region18: #{tpu_custom_call.1} parent=1 // pred_check
      %p61 = pneg %p60
    $region19: #{tpu_custom_call.1} parent=1 // pred_check_branch
      %63 = sbr.rel (%p61) target = $region21
    $region20: #{tpu_custom_call.1} parent=1 // pred_region
      %64 = vst [vmem:[#allocation2] sm:$0xff] 0.0
    $region21: #{tpu_custom_call.1} parent=1 // pred_fallthru
      _
    %v65 = vld [vmem:[#allocation6] sm:$0xff]
    %v66 = vld [vmem:[#allocation6 + $0x8] sm:$0xff]
    %v67 = vld [vmem:[#allocation3] sm:$0xff]
    %v68 = vld [vmem:[#allocation3 + $0x8] sm:$0xff]
    %v69 = vsub.f32 %v65, %v67
    %v70 = vsub.f32 %v66, %v68
    %v71 = vadd.f32 %v65, 1e-10
    %v72 = vadd.f32 %v66, 1e-10
    %v73 = vrcp.pop %v71
    %v74 = vmul.f32 %v69, %v73
    %v75 = vrcp.pop %v72
    %v76 = vmul.f32 %v70, %v75
    %v77 = vand.u32 2147483647, %v74
    %v78 = vand.u32 2147483647, %v76
    %v79 = vld [vmem:[#allocation2] sm:$0xff]
    %v80 = vadd.f32 %v77, %v78
    %v81 = vadd.f32 %v79, %v80
    %82 = vst [vmem:[#allocation2] sm:$0xff] %v81
    // Predicated region
    $region22: #{tpu_custom_call.1} parent=1 // pred_check
      %p83 = pneg %p60
    $region23: #{tpu_custom_call.1} parent=1 // pred_check_branch
      %85 = sbr.rel (%p83) target = $region25
    $region24: #{tpu_custom_call.1} parent=1 // pred_region
      %v86 = vld [vmem:[#allocation2] sm:$0xff]
      %87 = vst [vmem:[#allocation8] sm:$0xff] %v86
    $region25: #{tpu_custom_call.1} parent=1 // pred_fallthru
      _
    // Predicated region
    $region26: #{tpu_custom_call.1} parent=1 // pred_check
      _
    $region27: #{tpu_custom_call.1} parent=1 // pred_check_branch
      %89 = sbr.rel (0) target = $region29
    $region28: #{tpu_custom_call.1} parent=1 // pred_region
      %s91 = ssub.s32 128, 128
      %92 = vsyncadd [#allocation5], %s91
      %s94 = sshll.u32 [#allocation8], 4
      %s95 = int_to_ptr.vmem [resolvable:$true] %s94
      %97 = dma.vmem_to_hbm [thread:$0]  %s95, 128, %s2, [#allocation5]
    $region29: #{tpu_custom_call.1} parent=1 // pred_fallthru
      _
    // Predicated region
    $region30: #{tpu_custom_call.1} parent=1 // pred_check
      _
    $region31: #{tpu_custom_call.1} parent=1 // pred_check_branch
      %99 = sbr.rel (0) target = $region33
    $region32: #{tpu_custom_call.1} parent=1 // pred_region
      %100 = dma.done [#allocation5], 128
    $region33: #{tpu_custom_call.1} parent=1 // pred_fallthru
      _
    %101 = vsyncpa [#allocation4], 1
    %102 = vsyncpa [#allocation7], 1
    %103 = vsyncpa [#allocation5], 1

</llo_original>
